<compile_context>
chip_gen: v6e
topology: v6e:2x2x1
jax: 0.10.0
libtpu: 0.0.40
codegen_flags: <defaults>
</compile_context>

<pallas_src>
import jax
import jax.numpy as jnp
from jax.experimental import pallas as pl
from jax.experimental.pallas import tpu as pltpu


def _round_up(x, m):
    return (x + m - 1) // m * m


def _make_kernel(*, TS, TB, S_pad, D, V, nslots):
    assert TS % nslots == 0, "TS must be a multiple of nslots for chunked waits"
    rows_per_slot = TS // nslots
    unroll = nslots  # issue-loop unroll == nslots -> static semaphore index

    def kernel(ids_ref, pos_ref, tok_hbm, out_ref, sem_ref):
        # ids_ref : [num_tiles * TS] int32 in SMEM (scalar prefetch, pre-clamped)
        # pos_ref : (S_pad, D) resident VMEM position slab (constant block idx)
        # tok_hbm : (V, D) token table left in HBM (pl.ANY)
        # out_ref : (TS, D) output tile; also the DMA gather destination
        # sem_ref : (nslots,) DMA semaphores
        base = pl.program_id(0) * TS

        # --- Issue: one row-gather DMA per token, straight into out_ref. ---
        # Flat loop over TS tokens, statically unrolled by `unroll` so the
        # semaphore index is a compile-time constant and descriptor setup can
        # co-issue across the scalar/misc slots.
        @pl.loop(0, TS // unroll)
        def _issue(blk):
            r0 = pl.multiple_of(blk * unroll, unroll)
            for u in range(unroll):            # static partial unroll
                r = r0 + u
                tid = ids_ref[base + r]        # already clamped in wrapper
                pltpu.make_async_copy(
                    tok_hbm.at[pl.ds(tid, 1), :],
                    out_ref.at[pl.ds(r, 1), :],
                    sem_ref.at[u],             # u == r % nslots (static)
                ).start()

        # --- Drain: one byte-count-matched wait per semaphore slot. ---
        # Each slot received exactly rows_per_slot copies of identical (1, D)
        # shape, so a single dummy wait of shape (rows_per_slot, D) consumes
        # the full count.  Dummy dst slices collectively cover the whole out
        # block so later reads are ordered after the waits.
        for k in range(nslots):                # static
            dst = out_ref.at[pl.ds(k * rows_per_slot, rows_per_slot), :]
            if rows_per_slot <= V:
                src = tok_hbm.at[pl.ds(0, rows_per_slot), :]
            else:
                src = dst                      # shape-matched dummy; never started
            pltpu.make_async_copy(src, dst, sem_ref.at[k]).wait()

        # --- One dense in-place add of the resident position slab. ---
        # (TS, D) -> (TB, S_pad, D) is a leading-dim split (layout-free) since
        # S_pad is a sublane multiple; no explicit f32 upcast (bf16 stays bf16).
        tok = out_ref[...].reshape(TB, S_pad, D)
        pos = pos_ref[...]
        out_ref[...] = (tok + pos[None, :, :]).astype(out_ref.dtype).reshape(TS, D)

    return kernel


def clip_text_embeddings(input_ids, token_table, pos_table, *,
                         target_tokens_per_tile=1024, nslots=8):
    """Pallas forward for CLIPTextEmbeddings.

    input_ids:   [B, S] integer token ids
    token_table: [V, D] token embedding weight
    pos_table:   [P, D] position embedding weight (P >= S)
    returns:     [B, S, D] in token_table.dtype
    """
    B, S = input_ids.shape
    V, D = token_table.shape
    P, Dp = pos_table.shape
    assert D == Dp, "embedding dims must match"
    assert S <= P, "sequence longer than max_position_embeddings"
    assert nslots & (nslots - 1) == 0, "nslots must be a power of two"

    # Pad S to a sublane multiple (8). Each grid step handles TB batch rows x
    # S_pad positions as one dense, lane-dense (TS, D) tile.
    S_pad = _round_up(S, 8)

    # Pick TB: ~target_tokens_per_tile tokens per step, capped so num_tiles >= 2
    # whenever B >= 2 (v7x has 2 TensorCores on the "parallel" axis; no-op on
    # v5e/v6e). Prefer a divisor of B so no padded batch rows are gathered.
    cap = max(1, target_tokens_per_tile // S_pad)
    cap = min(cap, B)
    if B >= 2:
        cap = min(cap, (B + 1) // 2)
    TB = cap
    for t in range(cap, max(1, cap // 2) - 1, -1):
        if B % t == 0:
            TB = t
            break
    B_pad = _round_up(B, TB)
    num_tiles = B_pad // TB
    TS = TB * S_pad
    assert TS % nslots == 0

    # Flat 1-D int32 ids for SMEM (avoids 2-D SMEM padding).  Clamp is hoisted
    # here (cheap XLA elementwise) so the in-kernel issue loop has no min/max.
    # Padded slots use token id 0 and are sliced away at the end.
    ids = jnp.zeros((B_pad, S_pad), jnp.int32)
    ids = ids.at[:B, :S].set(jnp.clip(input_ids.astype(jnp.int32), 0, V - 1))
    ids_flat = ids.reshape(B_pad * S_pad)

    # Position slab pos_table[:S], zero-padded to S_pad rows; stays resident
    # in VMEM (constant block index -> fetched once).
    pos_slab = jnp.zeros((S_pad, D), pos_table.dtype).at[:S].set(pos_table[:S])

    kernel = _make_kernel(TS=TS, TB=TB, S_pad=S_pad, D=D, V=V, nslots=nslots)

    grid_spec = pltpu.PrefetchScalarGridSpec(
        num_scalar_prefetch=1,                 # ids_flat -> SMEM
        grid=(num_tiles,),
        in_specs=[
            # position slab: constant block index -> resident across steps
            pl.BlockSpec((S_pad, D), lambda i, ids: (0, 0)),
            # token table: stays in HBM, gathered with manual row DMAs
            pl.BlockSpec(memory_space=pl.ANY),
        ],
        # Output flattened to (B_pad*S_pad, D): per-token DMA dst needs no
        # div/mod, and the block is fully sublane/lane dense for writeback.
        out_specs=pl.BlockSpec((TS, D), lambda i, ids: (i, 0)),
        scratch_shapes=[pltpu.SemaphoreType.DMA((nslots,))],
    )

    out = pl.pallas_call(
        kernel,
        out_shape=jax.ShapeDtypeStruct((B_pad * S_pad, D), token_table.dtype),
        grid_spec=grid_spec,
        compiler_params=pltpu.CompilerParams(
            dimension_semantics=("parallel",)),
    )(ids_flat, pos_slab, token_table)

    return out.reshape(B_pad, S_pad, D)[:B, :S, :]


if __name__ == "__main__":
    # Small, CLIP-like config (scaled down): vocab=64, max_pos=16, embed_dim=128.
    B, S = 2, 8
    VOCAB = 64
    MAX_POS = 16
    EMBED_DIM = 128

    key = jax.random.PRNGKey(0)
    k_tok, k_pos, k_ids = jax.random.split(key, 3)

    # Deterministic synthetic parameters (nn.Embedding ~ N(0, 1) init).
    token_table = jax.random.normal(k_tok, (VOCAB, EMBED_DIM), dtype=jnp.float32)
    pos_table = jax.random.normal(k_pos, (MAX_POS, EMBED_DIM), dtype=jnp.float32)
    input_ids = jax.random.randint(k_ids, (B, S), 0, VOCAB, dtype=jnp.int32)

    out = clip_text_embeddings(input_ids, token_table, pos_table)
    out = jax.block_until_ready(out)

    # Pure-JAX reference for correctness.
    ref = token_table[input_ids] + pos_table[:S][None, :, :]
    assert out.shape == (B, S, EMBED_DIM)
    assert jnp.allclose(out, ref, atol=1e-6), "mismatch vs reference"

    print("KERNEL_OK")
</pallas_src>

<mosaic_0001>
module attributes {stable_mosaic.version = 11 : i64} {
  func.func @kernel(%arg0: i32, %arg1: memref<16xi32, #tpu.memory_space<smem>>, %arg2: memref<8x128xf32, #tpu.memory_space<vmem>>, %arg3: memref<64x128xf32, #tpu.memory_space<any>>, %arg4: memref<8x128xf32, #tpu.memory_space<vmem>>, %arg5: memref<8x!tpu.dma_semaphore, #tpu.memory_space<semaphore_mem>>) attributes {dimension_semantics = [#tpu.dimension_semantics<parallel>], iteration_bounds = array<i64: 2>, scalar_prefetch = 1 : i64, scratch_operands = 1 : i64, tpu.core_type = #tpu.core_type<tc>, window_params = [{pipeline_mode = #tpu.pipeline_mode<synchronous>, transform_indices = @transform_0, window_bounds = array<i64: 8, 128>}, {}, {transform_indices = @transform_2, window_bounds = array<i64: 8, 128>}]} {
    %c8_i32 = arith.constant 8 : i32
    %0 = arith.muli %arg0, %c8_i32 : i32
    %c0_i32 = arith.constant 0 : i32
    %c1_i32 = arith.constant 1 : i32
    %1 = arith.muli %c0_i32, %c1_i32 : i32
    %c0_i32_0 = arith.constant 0 : i32
    %2 = arith.addi %c0_i32_0, %1 : i32
    %c8_i32_1 = arith.constant 8 : i32
    %3 = arith.muli %2, %c8_i32_1 : i32
    %4 = tpu.assume_multiple %3, 8 : i32
    %c0_i32_2 = arith.constant 0 : i32
    %5 = arith.addi %4, %c0_i32_2 : i32
    %6 = arith.addi %0, %5 : i32
    %7 = arith.index_cast %6 : i32 to index
    %8 = memref.load %arg1[%7] : memref<16xi32, #tpu.memory_space<smem>>
    %c0_i32_3 = arith.constant 0 : i32
    %c0_i32_4 = arith.constant 0 : i32
    %9 = tpu.memref_slice %arg3[%8, %c0_i32_4] : memref<64x128xf32, #tpu.memory_space<any>> -> memref<1x128xf32, #tpu.memory_space<any>>
    %c0_i32_5 = arith.constant 0 : i32
    %10 = tpu.memref_slice %arg4[%5, %c0_i32_5] : memref<8x128xf32, #tpu.memory_space<vmem>> -> memref<1x128xf32, #tpu.memory_space<vmem>>
    %11 = tpu.memref_slice %arg5[%c0_i32_3] : memref<8x!tpu.dma_semaphore, #tpu.memory_space<semaphore_mem>> -> memref<1x!tpu.dma_semaphore, #tpu.memory_space<semaphore_mem>>
    %12 = tpu.memref_squeeze %11 : memref<1x!tpu.dma_semaphore, #tpu.memory_space<semaphore_mem>> -> memref<!tpu.dma_semaphore, #tpu.memory_space<semaphore_mem>>
    tpu.enqueue_dma source(%9 : memref<1x128xf32, #tpu.memory_space<any>>) target(%10 : memref<1x128xf32, #tpu.memory_space<vmem>>) target_semaphore(%12 : memref<!tpu.dma_semaphore, #tpu.memory_space<semaphore_mem>>)
    %c1_i32_6 = arith.constant 1 : i32
    %13 = arith.addi %4, %c1_i32_6 : i32
    %14 = arith.addi %0, %13 : i32
    %15 = arith.index_cast %14 : i32 to index
    %16 = memref.load %arg1[%15] : memref<16xi32, #tpu.memory_space<smem>>
    %c1_i32_7 = arith.constant 1 : i32
    %c0_i32_8 = arith.constant 0 : i32
    %17 = tpu.memref_slice %arg3[%16, %c0_i32_8] : memref<64x128xf32, #tpu.memory_space<any>> -> memref<1x128xf32, #tpu.memory_space<any>>
    %c0_i32_9 = arith.constant 0 : i32
    %18 = tpu.memref_slice %arg4[%13, %c0_i32_9] : memref<8x128xf32, #tpu.memory_space<vmem>> -> memref<1x128xf32, #tpu.memory_space<vmem>>
    %19 = tpu.memref_slice %arg5[%c1_i32_7] : memref<8x!tpu.dma_semaphore, #tpu.memory_space<semaphore_mem>> -> memref<1x!tpu.dma_semaphore, #tpu.memory_space<semaphore_mem>>
    %20 = tpu.memref_squeeze %19 : memref<1x!tpu.dma_semaphore, #tpu.memory_space<semaphore_mem>> -> memref<!tpu.dma_semaphore, #tpu.memory_space<semaphore_mem>>
    tpu.enqueue_dma source(%17 : memref<1x128xf32, #tpu.memory_space<any>>) target(%18 : memref<1x128xf32, #tpu.memory_space<vmem>>) target_semaphore(%20 : memref<!tpu.dma_semaphore, #tpu.memory_space<semaphore_mem>>)
    %c2_i32 = arith.constant 2 : i32
    %21 = arith.addi %4, %c2_i32 : i32
    %22 = arith.addi %0, %21 : i32
    %23 = arith.index_cast %22 : i32 to index
    %24 = memref.load %arg1[%23] : memref<16xi32, #tpu.memory_space<smem>>
    %c2_i32_10 = arith.constant 2 : i32
    %c0_i32_11 = arith.constant 0 : i32
    %25 = tpu.memref_slice %arg3[%24, %c0_i32_11] : memref<64x128xf32, #tpu.memory_space<any>> -> memref<1x128xf32, #tpu.memory_space<any>>
    %c0_i32_12 = arith.constant 0 : i32
    %26 = tpu.memref_slice %arg4[%21, %c0_i32_12] : memref<8x128xf32, #tpu.memory_space<vmem>> -> memref<1x128xf32, #tpu.memory_space<vmem>>
    %27 = tpu.memref_slice %arg5[%c2_i32_10] : memref<8x!tpu.dma_semaphore, #tpu.memory_space<semaphore_mem>> -> memref<1x!tpu.dma_semaphore, #tpu.memory_space<semaphore_mem>>
    %28 = tpu.memref_squeeze %27 : memref<1x!tpu.dma_semaphore, #tpu.memory_space<semaphore_mem>> -> memref<!tpu.dma_semaphore, #tpu.memory_space<semaphore_mem>>
    tpu.enqueue_dma source(%25 : memref<1x128xf32, #tpu.memory_space<any>>) target(%26 : memref<1x128xf32, #tpu.memory_space<vmem>>) target_semaphore(%28 : memref<!tpu.dma_semaphore, #tpu.memory_space<semaphore_mem>>)
    %c3_i32 = arith.constant 3 : i32
    %29 = arith.addi %4, %c3_i32 : i32
    %30 = arith.addi %0, %29 : i32
    %31 = arith.index_cast %30 : i32 to index
    %32 = memref.load %arg1[%31] : memref<16xi32, #tpu.memory_space<smem>>
    %c3_i32_13 = arith.constant 3 : i32
    %c0_i32_14 = arith.constant 0 : i32
    %33 = tpu.memref_slice %arg3[%32, %c0_i32_14] : memref<64x128xf32, #tpu.memory_space<any>> -> memref<1x128xf32, #tpu.memory_space<any>>
    %c0_i32_15 = arith.constant 0 : i32
    %34 = tpu.memref_slice %arg4[%29, %c0_i32_15] : memref<8x128xf32, #tpu.memory_space<vmem>> -> memref<1x128xf32, #tpu.memory_space<vmem>>
    %35 = tpu.memref_slice %arg5[%c3_i32_13] : memref<8x!tpu.dma_semaphore, #tpu.memory_space<semaphore_mem>> -> memref<1x!tpu.dma_semaphore, #tpu.memory_space<semaphore_mem>>
    %36 = tpu.memref_squeeze %35 : memref<1x!tpu.dma_semaphore, #tpu.memory_space<semaphore_mem>> -> memref<!tpu.dma_semaphore, #tpu.memory_space<semaphore_mem>>
    tpu.enqueue_dma source(%33 : memref<1x128xf32, #tpu.memory_space<any>>) target(%34 : memref<1x128xf32, #tpu.memory_space<vmem>>) target_semaphore(%36 : memref<!tpu.dma_semaphore, #tpu.memory_space<semaphore_mem>>)
    %c4_i32 = arith.constant 4 : i32
    %37 = arith.addi %4, %c4_i32 : i32
    %38 = arith.addi %0, %37 : i32
    %39 = arith.index_cast %38 : i32 to index
    %40 = memref.load %arg1[%39] : memref<16xi32, #tpu.memory_space<smem>>
    %c4_i32_16 = arith.constant 4 : i32
    %c0_i32_17 = arith.constant 0 : i32
    %41 = tpu.memref_slice %arg3[%40, %c0_i32_17] : memref<64x128xf32, #tpu.memory_space<any>> -> memref<1x128xf32, #tpu.memory_space<any>>
    %c0_i32_18 = arith.constant 0 : i32
    %42 = tpu.memref_slice %arg4[%37, %c0_i32_18] : memref<8x128xf32, #tpu.memory_space<vmem>> -> memref<1x128xf32, #tpu.memory_space<vmem>>
    %43 = tpu.memref_slice %arg5[%c4_i32_16] : memref<8x!tpu.dma_semaphore, #tpu.memory_space<semaphore_mem>> -> memref<1x!tpu.dma_semaphore, #tpu.memory_space<semaphore_mem>>
    %44 = tpu.memref_squeeze %43 : memref<1x!tpu.dma_semaphore, #tpu.memory_space<semaphore_mem>> -> memref<!tpu.dma_semaphore, #tpu.memory_space<semaphore_mem>>
    tpu.enqueue_dma source(%41 : memref<1x128xf32, #tpu.memory_space<any>>) target(%42 : memref<1x128xf32, #tpu.memory_space<vmem>>) target_semaphore(%44 : memref<!tpu.dma_semaphore, #tpu.memory_space<semaphore_mem>>)
    %c5_i32 = arith.constant 5 : i32
    %45 = arith.addi %4, %c5_i32 : i32
    %46 = arith.addi %0, %45 : i32
    %47 = arith.index_cast %46 : i32 to index
    %48 = memref.load %arg1[%47] : memref<16xi32, #tpu.memory_space<smem>>
    %c5_i32_19 = arith.constant 5 : i32
    %c0_i32_20 = arith.constant 0 : i32
    %49 = tpu.memref_slice %arg3[%48, %c0_i32_20] : memref<64x128xf32, #tpu.memory_space<any>> -> memref<1x128xf32, #tpu.memory_space<any>>
    %c0_i32_21 = arith.constant 0 : i32
    %50 = tpu.memref_slice %arg4[%45, %c0_i32_21] : memref<8x128xf32, #tpu.memory_space<vmem>> -> memref<1x128xf32, #tpu.memory_space<vmem>>
    %51 = tpu.memref_slice %arg5[%c5_i32_19] : memref<8x!tpu.dma_semaphore, #tpu.memory_space<semaphore_mem>> -> memref<1x!tpu.dma_semaphore, #tpu.memory_space<semaphore_mem>>
    %52 = tpu.memref_squeeze %51 : memref<1x!tpu.dma_semaphore, #tpu.memory_space<semaphore_mem>> -> memref<!tpu.dma_semaphore, #tpu.memory_space<semaphore_mem>>
    tpu.enqueue_dma source(%49 : memref<1x128xf32, #tpu.memory_space<any>>) target(%50 : memref<1x128xf32, #tpu.memory_space<vmem>>) target_semaphore(%52 : memref<!tpu.dma_semaphore, #tpu.memory_space<semaphore_mem>>)
    %c6_i32 = arith.constant 6 : i32
    %53 = arith.addi %4, %c6_i32 : i32
    %54 = arith.addi %0, %53 : i32
    %55 = arith.index_cast %54 : i32 to index
    %56 = memref.load %arg1[%55] : memref<16xi32, #tpu.memory_space<smem>>
    %c6_i32_22 = arith.constant 6 : i32
    %c0_i32_23 = arith.constant 0 : i32
    %57 = tpu.memref_slice %arg3[%56, %c0_i32_23] : memref<64x128xf32, #tpu.memory_space<any>> -> memref<1x128xf32, #tpu.memory_space<any>>
    %c0_i32_24 = arith.constant 0 : i32
    %58 = tpu.memref_slice %arg4[%53, %c0_i32_24] : memref<8x128xf32, #tpu.memory_space<vmem>> -> memref<1x128xf32, #tpu.memory_space<vmem>>
    %59 = tpu.memref_slice %arg5[%c6_i32_22] : memref<8x!tpu.dma_semaphore, #tpu.memory_space<semaphore_mem>> -> memref<1x!tpu.dma_semaphore, #tpu.memory_space<semaphore_mem>>
    %60 = tpu.memref_squeeze %59 : memref<1x!tpu.dma_semaphore, #tpu.memory_space<semaphore_mem>> -> memref<!tpu.dma_semaphore, #tpu.memory_space<semaphore_mem>>
    tpu.enqueue_dma source(%57 : memref<1x128xf32, #tpu.memory_space<any>>) target(%58 : memref<1x128xf32, #tpu.memory_space<vmem>>) target_semaphore(%60 : memref<!tpu.dma_semaphore, #tpu.memory_space<semaphore_mem>>)
    %c7_i32 = arith.constant 7 : i32
    %61 = arith.addi %4, %c7_i32 : i32
    %62 = arith.addi %0, %61 : i32
    %63 = arith.index_cast %62 : i32 to index
    %64 = memref.load %arg1[%63] : memref<16xi32, #tpu.memory_space<smem>>
    %c7_i32_25 = arith.constant 7 : i32
    %c0_i32_26 = arith.constant 0 : i32
    %65 = tpu.memref_slice %arg3[%64, %c0_i32_26] : memref<64x128xf32, #tpu.memory_space<any>> -> memref<1x128xf32, #tpu.memory_space<any>>
    %c0_i32_27 = arith.constant 0 : i32
    %66 = tpu.memref_slice %arg4[%61, %c0_i32_27] : memref<8x128xf32, #tpu.memory_space<vmem>> -> memref<1x128xf32, #tpu.memory_space<vmem>>
    %67 = tpu.memref_slice %arg5[%c7_i32_25] : memref<8x!tpu.dma_semaphore, #tpu.memory_space<semaphore_mem>> -> memref<1x!tpu.dma_semaphore, #tpu.memory_space<semaphore_mem>>
    %68 = tpu.memref_squeeze %67 : memref<1x!tpu.dma_semaphore, #tpu.memory_space<semaphore_mem>> -> memref<!tpu.dma_semaphore, #tpu.memory_space<semaphore_mem>>
    tpu.enqueue_dma source(%65 : memref<1x128xf32, #tpu.memory_space<any>>) target(%66 : memref<1x128xf32, #tpu.memory_space<vmem>>) target_semaphore(%68 : memref<!tpu.dma_semaphore, #tpu.memory_space<semaphore_mem>>)
    %c1_i32_28 = arith.constant 1 : i32
    %c0_i32_29 = arith.constant 0 : i32
    %c0_i32_30 = arith.constant 0 : i32
    %c0_i32_31 = arith.constant 0 : i32
    %69 = tpu.memref_slice %arg3[%c0_i32_30, %c0_i32_31] : memref<64x128xf32, #tpu.memory_space<any>> -> memref<1x128xf32, #tpu.memory_space<any>>
    %c0_i32_32 = arith.constant 0 : i32
    %c0_i32_33 = arith.constant 0 : i32
    %70 = tpu.memref_slice %arg4[%c0_i32_32, %c0_i32_33] : memref<8x128xf32, #tpu.memory_space<vmem>> -> memref<1x128xf32, #tpu.memory_space<vmem>>
    %71 = tpu.memref_slice %arg5[%c0_i32_29] : memref<8x!tpu.dma_semaphore, #tpu.memory_space<semaphore_mem>> -> memref<1x!tpu.dma_semaphore, #tpu.memory_space<semaphore_mem>>
    %72 = tpu.memref_squeeze %71 : memref<1x!tpu.dma_semaphore, #tpu.memory_space<semaphore_mem>> -> memref<!tpu.dma_semaphore, #tpu.memory_space<semaphore_mem>>
    tpu.wait_dma2 semaphore(%72 : memref<!tpu.dma_semaphore, #tpu.memory_space<semaphore_mem>>) src(%69 : memref<1x128xf32, #tpu.memory_space<any>>) dst(%70 : memref<1x128xf32, #tpu.memory_space<vmem>>)
    %c1_i32_34 = arith.constant 1 : i32
    %c0_i32_35 = arith.constant 0 : i32
    %c0_i32_36 = arith.constant 0 : i32
    %73 = tpu.memref_slice %arg3[%c0_i32_35, %c0_i32_36] : memref<64x128xf32, #tpu.memory_space<any>> -> memref<1x128xf32, #tpu.memory_space<any>>
    %c1_i32_37 = arith.constant 1 : i32
    %c0_i32_38 = arith.constant 0 : i32
    %74 = tpu.memref_slice %arg4[%c1_i32_37, %c0_i32_38] : memref<8x128xf32, #tpu.memory_space<vmem>> -> memref<1x128xf32, #tpu.memory_space<vmem>>
    %75 = tpu.memref_slice %arg5[%c1_i32_34] : memref<8x!tpu.dma_semaphore, #tpu.memory_space<semaphore_mem>> -> memref<1x!tpu.dma_semaphore, #tpu.memory_space<semaphore_mem>>
    %76 = tpu.memref_squeeze %75 : memref<1x!tpu.dma_semaphore, #tpu.memory_space<semaphore_mem>> -> memref<!tpu.dma_semaphore, #tpu.memory_space<semaphore_mem>>
    tpu.wait_dma2 semaphore(%76 : memref<!tpu.dma_semaphore, #tpu.memory_space<semaphore_mem>>) src(%73 : memref<1x128xf32, #tpu.memory_space<any>>) dst(%74 : memref<1x128xf32, #tpu.memory_space<vmem>>)
    %c2_i32_39 = arith.constant 2 : i32
    %c0_i32_40 = arith.constant 0 : i32
    %c0_i32_41 = arith.constant 0 : i32
    %77 = tpu.memref_slice %arg3[%c0_i32_40, %c0_i32_41] : memref<64x128xf32, #tpu.memory_space<any>> -> memref<1x128xf32, #tpu.memory_space<any>>
    %c2_i32_42 = arith.constant 2 : i32
    %c0_i32_43 = arith.constant 0 : i32
    %78 = tpu.memref_slice %arg4[%c2_i32_42, %c0_i32_43] : memref<8x128xf32, #tpu.memory_space<vmem>> -> memref<1x128xf32, #tpu.memory_space<vmem>>
    %79 = tpu.memref_slice %arg5[%c2_i32_39] : memref<8x!tpu.dma_semaphore, #tpu.memory_space<semaphore_mem>> -> memref<1x!tpu.dma_semaphore, #tpu.memory_space<semaphore_mem>>
    %80 = tpu.memref_squeeze %79 : memref<1x!tpu.dma_semaphore, #tpu.memory_space<semaphore_mem>> -> memref<!tpu.dma_semaphore, #tpu.memory_space<semaphore_mem>>
    tpu.wait_dma2 semaphore(%80 : memref<!tpu.dma_semaphore, #tpu.memory_space<semaphore_mem>>) src(%77 : memref<1x128xf32, #tpu.memory_space<any>>) dst(%78 : memref<1x128xf32, #tpu.memory_space<vmem>>)
    %c3_i32_44 = arith.constant 3 : i32
    %c0_i32_45 = arith.constant 0 : i32
    %c0_i32_46 = arith.constant 0 : i32
    %81 = tpu.memref_slice %arg3[%c0_i32_45, %c0_i32_46] : memref<64x128xf32, #tpu.memory_space<any>> -> memref<1x128xf32, #tpu.memory_space<any>>
    %c3_i32_47 = arith.constant 3 : i32
    %c0_i32_48 = arith.constant 0 : i32
    %82 = tpu.memref_slice %arg4[%c3_i32_47, %c0_i32_48] : memref<8x128xf32, #tpu.memory_space<vmem>> -> memref<1x128xf32, #tpu.memory_space<vmem>>
    %83 = tpu.memref_slice %arg5[%c3_i32_44] : memref<8x!tpu.dma_semaphore, #tpu.memory_space<semaphore_mem>> -> memref<1x!tpu.dma_semaphore, #tpu.memory_space<semaphore_mem>>
    %84 = tpu.memref_squeeze %83 : memref<1x!tpu.dma_semaphore, #tpu.memory_space<semaphore_mem>> -> memref<!tpu.dma_semaphore, #tpu.memory_space<semaphore_mem>>
    tpu.wait_dma2 semaphore(%84 : memref<!tpu.dma_semaphore, #tpu.memory_space<semaphore_mem>>) src(%81 : memref<1x128xf32, #tpu.memory_space<any>>) dst(%82 : memref<1x128xf32, #tpu.memory_space<vmem>>)
    %c4_i32_49 = arith.constant 4 : i32
    %c0_i32_50 = arith.constant 0 : i32
    %c0_i32_51 = arith.constant 0 : i32
    %85 = tpu.memref_slice %arg3[%c0_i32_50, %c0_i32_51] : memref<64x128xf32, #tpu.memory_space<any>> -> memref<1x128xf32, #tpu.memory_space<any>>
    %c4_i32_52 = arith.constant 4 : i32
    %c0_i32_53 = arith.constant 0 : i32
    %86 = tpu.memref_slice %arg4[%c4_i32_52, %c0_i32_53] : memref<8x128xf32, #tpu.memory_space<vmem>> -> memref<1x128xf32, #tpu.memory_space<vmem>>
    %87 = tpu.memref_slice %arg5[%c4_i32_49] : memref<8x!tpu.dma_semaphore, #tpu.memory_space<semaphore_mem>> -> memref<1x!tpu.dma_semaphore, #tpu.memory_space<semaphore_mem>>
    %88 = tpu.memref_squeeze %87 : memref<1x!tpu.dma_semaphore, #tpu.memory_space<semaphore_mem>> -> memref<!tpu.dma_semaphore, #tpu.memory_space<semaphore_mem>>
    tpu.wait_dma2 semaphore(%88 : memref<!tpu.dma_semaphore, #tpu.memory_space<semaphore_mem>>) src(%85 : memref<1x128xf32, #tpu.memory_space<any>>) dst(%86 : memref<1x128xf32, #tpu.memory_space<vmem>>)
    %c5_i32_54 = arith.constant 5 : i32
    %c0_i32_55 = arith.constant 0 : i32
    %c0_i32_56 = arith.constant 0 : i32
    %89 = tpu.memref_slice %arg3[%c0_i32_55, %c0_i32_56] : memref<64x128xf32, #tpu.memory_space<any>> -> memref<1x128xf32, #tpu.memory_space<any>>
    %c5_i32_57 = arith.constant 5 : i32
    %c0_i32_58 = arith.constant 0 : i32
    %90 = tpu.memref_slice %arg4[%c5_i32_57, %c0_i32_58] : memref<8x128xf32, #tpu.memory_space<vmem>> -> memref<1x128xf32, #tpu.memory_space<vmem>>
    %91 = tpu.memref_slice %arg5[%c5_i32_54] : memref<8x!tpu.dma_semaphore, #tpu.memory_space<semaphore_mem>> -> memref<1x!tpu.dma_semaphore, #tpu.memory_space<semaphore_mem>>
    %92 = tpu.memref_squeeze %91 : memref<1x!tpu.dma_semaphore, #tpu.memory_space<semaphore_mem>> -> memref<!tpu.dma_semaphore, #tpu.memory_space<semaphore_mem>>
    tpu.wait_dma2 semaphore(%92 : memref<!tpu.dma_semaphore, #tpu.memory_space<semaphore_mem>>) src(%89 : memref<1x128xf32, #tpu.memory_space<any>>) dst(%90 : memref<1x128xf32, #tpu.memory_space<vmem>>)
    %c6_i32_59 = arith.constant 6 : i32
    %c0_i32_60 = arith.constant 0 : i32
    %c0_i32_61 = arith.constant 0 : i32
    %93 = tpu.memref_slice %arg3[%c0_i32_60, %c0_i32_61] : memref<64x128xf32, #tpu.memory_space<any>> -> memref<1x128xf32, #tpu.memory_space<any>>
    %c6_i32_62 = arith.constant 6 : i32
    %c0_i32_63 = arith.constant 0 : i32
    %94 = tpu.memref_slice %arg4[%c6_i32_62, %c0_i32_63] : memref<8x128xf32, #tpu.memory_space<vmem>> -> memref<1x128xf32, #tpu.memory_space<vmem>>
    %95 = tpu.memref_slice %arg5[%c6_i32_59] : memref<8x!tpu.dma_semaphore, #tpu.memory_space<semaphore_mem>> -> memref<1x!tpu.dma_semaphore, #tpu.memory_space<semaphore_mem>>
    %96 = tpu.memref_squeeze %95 : memref<1x!tpu.dma_semaphore, #tpu.memory_space<semaphore_mem>> -> memref<!tpu.dma_semaphore, #tpu.memory_space<semaphore_mem>>
    tpu.wait_dma2 semaphore(%96 : memref<!tpu.dma_semaphore, #tpu.memory_space<semaphore_mem>>) src(%93 : memref<1x128xf32, #tpu.memory_space<any>>) dst(%94 : memref<1x128xf32, #tpu.memory_space<vmem>>)
    %c7_i32_64 = arith.constant 7 : i32
    %c0_i32_65 = arith.constant 0 : i32
    %c0_i32_66 = arith.constant 0 : i32
    %97 = tpu.memref_slice %arg3[%c0_i32_65, %c0_i32_66] : memref<64x128xf32, #tpu.memory_space<any>> -> memref<1x128xf32, #tpu.memory_space<any>>
    %c7_i32_67 = arith.constant 7 : i32
    %c0_i32_68 = arith.constant 0 : i32
    %98 = tpu.memref_slice %arg4[%c7_i32_67, %c0_i32_68] : memref<8x128xf32, #tpu.memory_space<vmem>> -> memref<1x128xf32, #tpu.memory_space<vmem>>
    %99 = tpu.memref_slice %arg5[%c7_i32_64] : memref<8x!tpu.dma_semaphore, #tpu.memory_space<semaphore_mem>> -> memref<1x!tpu.dma_semaphore, #tpu.memory_space<semaphore_mem>>
    %100 = tpu.memref_squeeze %99 : memref<1x!tpu.dma_semaphore, #tpu.memory_space<semaphore_mem>> -> memref<!tpu.dma_semaphore, #tpu.memory_space<semaphore_mem>>
    tpu.wait_dma2 semaphore(%100 : memref<!tpu.dma_semaphore, #tpu.memory_space<semaphore_mem>>) src(%97 : memref<1x128xf32, #tpu.memory_space<any>>) dst(%98 : memref<1x128xf32, #tpu.memory_space<vmem>>)
    %c0 = arith.constant 0 : index
    %c0_69 = arith.constant 0 : index
    %101 = vector.load %arg4[%c0, %c0_69] : memref<8x128xf32, #tpu.memory_space<vmem>>, vector<8x128xf32>
    %102 = vector.shape_cast %101 : vector<8x128xf32> to vector<1x8x128xf32>
    %c0_70 = arith.constant 0 : index
    %c0_71 = arith.constant 0 : index
    %103 = vector.load %arg2[%c0_70, %c0_71] : memref<8x128xf32, #tpu.memory_space<vmem>>, vector<8x128xf32>
    %104 = vector.shape_cast %103 : vector<8x128xf32> to vector<1x8x128xf32>
    %105 = arith.addf %102, %104 : vector<1x8x128xf32>
    %106 = vector.shape_cast %105 : vector<1x8x128xf32> to vector<8x128xf32>
    %c0_72 = arith.constant 0 : index
    %c0_73 = arith.constant 0 : index
    %107 = vector.load %arg4[%c0_72, %c0_73] : memref<8x128xf32, #tpu.memory_space<vmem>>, vector<8x128xf32>
    tpu.vector_store %arg4[%c0_72, %c0_73], %106 {strides = array<i32>} : memref<8x128xf32, #tpu.memory_space<vmem>>, vector<8x128xf32>,
    return
  }
  func.func @transform_0(%arg0: i32, %arg1: memref<16xi32, #tpu.memory_space<smem>>) -> (i32, i32) {
    %c0_i32 = arith.constant 0 : i32
    %c0_i32_0 = arith.constant 0 : i32
    %c0_i32_1 = arith.constant 0 : i32
    return %c0_i32, %c0_i32_0 : i32, i32
  }
  func.func @transform_2(%arg0: i32, %arg1: memref<16xi32, #tpu.memory_space<smem>>) -> (i32, i32) {
    %c0_i32 = arith.constant 0 : i32
    %c0_i32_0 = arith.constant 0 : i32
    return %arg0, %c0_i32 : i32, i32
  }
}

</mosaic_0001>

<llo_original>
// kernel: tpu_custom_call.1
$region0: #{tpu_custom_call.1}
  #allocation0 [shape = 'u32[]', space=smem, size = 0x4, offset = 0x4, fixed_abs, tag = 'smem constant byte address 0x4 - core index']
  #allocation1 [shape = 'u32[144,128]{1,0:T(1,128)}', space=vmem, size = 0x12000, scoped, tag = 'internal scratch']
  #allocation2 [shape = 's32[8]{0}', space=sflag, size = 0x20, scoped, tag = 'scratch operand']
  #allocation3 [shape = 's32[1]{0}', space=sflag, size = 0x4, scoped, tag = 'scoped memory for tpu_custom_call.1']
  #allocation4 [shape = 'u8[512]{0}', space=smem, size = 0x200, scoped, tag = 'prefetched SMEM operand 0']
  #allocation9 [shape = 's32[]', space=sflag, size = 0x4, offset = 0, fixed_abs, tag = 'sflag constant byte address 0x0 - dummy sync flag']
  #allocation10 [shape = 's32[]', space=sflag, size = 0x4, offset = 0, fixed_abs, tag = 'sflag constant byte address 0x0 - dummy sync flag']
  #allocation11 [shape = 'u32[]', space=smem, size = 0x4, offset = 0x44, fixed_abs, tag = 'smem constant byte address 0x44 - assertion arg 0']
  #allocation12 [shape = 'u32[]', space=smem, size = 0x4, offset = 0x48, fixed_abs, tag = 'smem constant byte address 0x48 - assertion arg 1']
  #allocation13 [shape = 's32[]', space=sflag, size = 0x4, offset = 0, fixed_abs, tag = 'sflag constant byte address 0x0 - dummy sync flag']
  #allocation14 [shape = 's32[]', space=sflag, size = 0x4, offset = 0, fixed_abs, tag = 'sflag constant byte address 0x0 - dummy sync flag']
  #allocation15 [shape = 's32[]', space=sflag, size = 0x4, offset = 0, fixed_abs, tag = 'sflag constant byte address 0x0 - dummy sync flag']
  #allocation16 [shape = 's32[]', space=sflag, size = 0x4, offset = 0, fixed_abs, tag = 'sflag constant byte address 0x0 - dummy sync flag']
  #allocation17 [shape = 's32[]', space=sflag, size = 0x4, offset = 0, fixed_abs, tag = 'sflag constant byte address 0x0 - dummy sync flag']
  #allocation18 [shape = 's32[]', space=sflag, size = 0x4, offset = 0, fixed_abs, tag = 'sflag constant byte address 0x0 - dummy sync flag']
  #allocation19 [shape = 's32[]', space=sflag, size = 0x4, offset = 0, fixed_abs, tag = 'sflag constant byte address 0x0 - dummy sync flag']
  #allocation20 [shape = 's32[]', space=sflag, size = 0x4, offset = 0, fixed_abs, tag = 'sflag constant byte address 0x0 - dummy sync flag']
  #allocation21 [shape = 's32[]', space=sflag, size = 0x4, offset = 0, fixed_abs, tag = 'sflag constant byte address 0x0 - dummy sync flag']
  #allocation22 [shape = 's32[]', space=sflag, size = 0x4, offset = 0, fixed_abs, tag = 'sflag constant byte address 0x0 - dummy sync flag']
  #allocation23 [shape = 's32[]', space=sflag, size = 0x4, offset = 0, fixed_abs, tag = 'sflag constant byte address 0x0 - dummy sync flag']
  #allocation24 [shape = 's32[]', space=sflag, size = 0x4, offset = 0, fixed_abs, tag = 'sflag constant byte address 0x0 - dummy sync flag']
  #allocation25 [shape = 's32[]', space=sflag, size = 0x4, offset = 0, fixed_abs, tag = 'sflag constant byte address 0x0 - dummy sync flag']
  #allocation26 [shape = 's32[]', space=sflag, size = 0x4, offset = 0, fixed_abs, tag = 'sflag constant byte address 0x0 - dummy sync flag']
  %s0 = inlined_call_operand.hbm [shape: s32[16], index: 0, kind: input, shape index: {}]
  %s1 = inlined_call_operand.hbm [shape: f32[8,128], index: 1, kind: input, shape index: {}]
  %s2 = inlined_call_operand.hbm [shape: f32[64,128], index: 2, kind: input, shape index: {}]
  %s3 = inlined_call_operand.hbm [shape: f32[16,128], index: 3, kind: output, shape index: {}]
  %s4 = sld [smem:[#allocation0]]
  $region73: #{tpu_custom_call.1} parent=0
    _
  %s6 = ssub.s32 1, %s4
  %s7 = scalar_select 0, %s6, %s4
  %9 = dma.hbm_to_smem %s0, 16, [#allocation4], [#allocation3]
  %10 = dma.done [#allocation3], 16
  %11 = sfence
  $region1: #{tpu_custom_call.1} parent=0
    #allocation5 [shape = 'u8[4096]{0}', space=vmem, size = 0x1000, scoped, tag = 'input window, operand 1, single buffered']
    #allocation6 [shape = 's32[2]{0}', space=sflag, size = 0x8, scoped, tag = 'scoped memory for tpu_custom_call.1']
    #allocation7 [shape = 's32[2]{0}', space=sflag, size = 0x8, scoped, tag = 'scoped memory for tpu_custom_call.1']
    #allocation8 [shape = 'u8[8192]{0}', space=vmem, size = 0x2000, scoped, tag = 'output window, operand 0']
    %12 = vsyncpa [#allocation6], 0
    %13 = vsyncpa [#allocation7], 0
    %s14 = scalar_lea.sflag [#allocation7], 1
    %15 = vsyncpa %s14, 0
    loop: start=0, step=1, limit=4
    $region2: #{tpu_custom_call.1} parent=1 // loop_pre_header
      _
    $region3: #{tpu_custom_call.1} parent=1 // loop_header
      %s17 = sphi 0, %s21
      %p18 = scmp.ge.s32.totalorder %s17, 4
      %s25 = sphi 0, %s25
      %s27 = sphi 0, %s25
      %s28 = sphi 0, %s27
      %s42 = sphi 0, %s28
      %s48 = sphi 0, %s50
      %s51 = sphi 0, %s48
      %s52 = sphi 0, %s51
      %s68 = sphi 0, %s52
    $region4: #{tpu_custom_call.1} parent=1 // loop_header_branch
      %20 = sbr.rel (%p18) target = $region8
    $region5: #{tpu_custom_call.1} parent=1 // loop_body
      %s22 = ssub.s32 %s17, 1
      %s23 = ssub.s32 %s17, 2
      %s24 = sadd.s32 %s17, 1
      %s26 = sadd.s32 %s25, 1
      %p29 = scmp.eq.s32.totalorder %s17, 1
      %p30 = scmp.ne.s32.totalorder %s25, %s27
      %p31 = scmp.eq.s32.totalorder %s17, 0
      %p32 = por %p30, %p31
      %p33 = scmp.ne.s32.totalorder %s25, %s27
      %p34 = scmp.eq.s32.totalorder %s22, 1
      %p35 = por %p33, %p34
      %p36 = scmp.ne.s32.totalorder %s27, %s28
      %p37 = scmp.eq.s32.totalorder %s22, 0
      %p38 = por %p36, %p37
      %p39 = scmp.ne.s32.totalorder %s27, %s28
      %p40 = scmp.eq.s32.totalorder %s23, 1
      %p41 = por %p39, %p40
      %p43 = scmp.ne.s32.totalorder %s28, %s42
      %p44 = scmp.eq.s32.totalorder %s23, 0
      %p45 = por %p43, %p44
      %s46 = ssub.s32 %s17, %s24
      %p47 = scmp.eq.s32.totalorder %s46, 0
      %s49 = sadd.s32 %s48, 1
      %s50 = scalar_select %p47, %s48, %s49
      %p53 = pneg %p47
      %p54 = scmp.eq.s32.totalorder %s17, 1
      %p55 = por %p53, %p54
      %p56 = scmp.ne.s32.totalorder %s48, %s51
      %p57 = scmp.eq.s32.totalorder %s17, 0
      %p58 = por %p56, %p57
      %p59 = scmp.ne.s32.totalorder %s48, %s51
      %p60 = scmp.eq.s32.totalorder %s22, 1
      %p61 = por %p59, %p60
      %p62 = scmp.ne.s32.totalorder %s51, %s52
      %p63 = scmp.eq.s32.totalorder %s22, 0
      %p64 = por %p62, %p63
      %p65 = scmp.ne.s32.totalorder %s51, %s52
      %p66 = scmp.eq.s32.totalorder %s23, 1
      %p67 = por %p65, %p66
      %p69 = scmp.ne.s32.totalorder %s52, %s68
      %p70 = scmp.eq.s32.totalorder %s23, 0
      %p71 = por %p69, %p70
      %p72 = scmp.le.s32.totalorder 1, %s17
      %p73 = scmp.lt.s32.totalorder %s17, 3
      %p74 = pnand %p72, %p73
      %p75 = pneg %p74
      // Predicated region
      $region9: #{tpu_custom_call.1} parent=5 // pred_check
        _
      $region10: #{tpu_custom_call.1} parent=5 // pred_check_branch
        %77 = sbr.rel (%p74) target = $region12
      $region11: #{tpu_custom_call.1} parent=5 // pred_region
        %s78 = ssub.s32 %s17, 1
        // Predicated region
        $region13: #{tpu_custom_call.1} parent=11 // pred_check
          %p79 = pneg %p38
        $region14: #{tpu_custom_call.1} parent=11 // pred_check_branch
          %81 = sbr.rel (%p79) target = $region16
        $region15: #{tpu_custom_call.1} parent=11 // pred_region
          %s83 = ssub.s32 128, 128
          %84 = vsyncadd [#allocation6], %s83
          %s86 = sshll.u32 [#allocation5], 4
          %s87 = int_to_ptr.vmem [resolvable:$true] %s86
          %89 = dma.hbm_to_vmem [thread:$0]  %s1, 128, %s87, [#allocation6]
        $region16: #{tpu_custom_call.1} parent=11 // pred_fallthru
          _
      $region12: #{tpu_custom_call.1} parent=5 // pred_fallthru
        _
      %p90 = scmp.lt.s32.totalorder %s17, 2
      // Predicated region
      $region17: #{tpu_custom_call.1} parent=5 // pred_check
        %p91 = pneg %p90
      $region18: #{tpu_custom_call.1} parent=5 // pred_check_branch
        %93 = sbr.rel (%p91) target = $region20
      $region19: #{tpu_custom_call.1} parent=5 // pred_region
        _
      $region20: #{tpu_custom_call.1} parent=5 // pred_fallthru
        _
      %p94 = scmp.le.s32.totalorder 1, %s17
      %p95 = scmp.lt.s32.totalorder %s17, 3
      %p96 = pnand %p94, %p95
      %p97 = pneg %p96
      // Predicated region
      $region21: #{tpu_custom_call.1} parent=5 // pred_check
        _
      $region22: #{tpu_custom_call.1} parent=5 // pred_check_branch
        %99 = sbr.rel (%p96) target = $region24
      $region23: #{tpu_custom_call.1} parent=5 // pred_region
        %s100 = ssub.s32 %s17, 1
        // Predicated region
        $region25: #{tpu_custom_call.1} parent=23 // pred_check
          %p101 = pneg %p38
        $region26: #{tpu_custom_call.1} parent=23 // pred_check_branch
          %103 = sbr.rel (%p101) target = $region28
        $region27: #{tpu_custom_call.1} parent=23 // pred_region
          %104 = dma.done [#allocation6], 128
        $region28: #{tpu_custom_call.1} parent=23 // pred_fallthru
          _
        %p105 = pneg %p38
        %p106 = pneg %p35
        %p107 = pneg %p64
        %p108 = pneg %p61
        %s109 = sand.u32 %s51, 1
        %s110 = scalar_lea.sflag [#allocation7], %s109
        %s111 = sand.u32 %s51, 1
        %s112 = smul.addr %s111, 8
        %s113 = scalar_lea.vmem [#allocation8], %s112
        %s114 = smul.u32 %s22, 8
        %s115 = sadd.s32 %s114, 0
        %s116 = sld [smem:[#allocation4 + %s115]]
        %s117 = smul.addr %s116, 16
        %s118 = scalar_lea.hbm %s2, %s117
        // Predicated region
        $region29: #{tpu_custom_call.1} parent=23 // pred_check
          _
        $region30: #{tpu_custom_call.1} parent=23 // pred_check_branch
          %120 = sbr.rel target = $region32
        $region31: #{tpu_custom_call.1} parent=23 // pred_region
          %121 = sst [smem:[#allocation11]] [#allocation10]
          %122 = sst [smem:[#allocation12]] [#allocation9]
        $region32: #{tpu_custom_call.1} parent=23 // pred_fallthru
          _
        %124 = shalt.err (0)
        %s126 = sshll.u32 %s113, 4
        %s127 = int_to_ptr.vmem [resolvable:$true] %s126
        %129 = dma.hbm_to_vmem [thread:$0]  %s118, 16, %s127, [#allocation2]
        %s130 = sadd.s32 0, 1
        %s131 = sadd.s32 %s114, %s130
        %s132 = sld [smem:[#allocation4 + %s131]]
        %s133 = smul.addr %s132, 16
        %s134 = scalar_lea.hbm %s2, %s133
        %s135 = scalar_lea.vmem %s113, %s130 [#allocation8]
        %s136 = scalar_lea.sflag [#allocation2], 1
        // Predicated region
        $region33: #{tpu_custom_call.1} parent=23 // pred_check
          _
        $region34: #{tpu_custom_call.1} parent=23 // pred_check_branch
          %138 = sbr.rel target = $region36
        $region35: #{tpu_custom_call.1} parent=23 // pred_region
          %139 = sst [smem:[#allocation11]] [#allocation14]
          %140 = sst [smem:[#allocation12]] [#allocation13]
        $region36: #{tpu_custom_call.1} parent=23 // pred_fallthru
          _
        %142 = shalt.err (0)
        %s144 = sshll.u32 %s135, 4
        %s145 = int_to_ptr.vmem [resolvable:$true] %s144
        %147 = dma.hbm_to_vmem [thread:$0]  %s134, 16, %s145, %s136
        %s148 = sadd.s32 0, 2
        %s149 = sadd.s32 %s114, %s148
        %s150 = sld [smem:[#allocation4 + %s149]]
        %s151 = smul.addr %s150, 16
        %s152 = scalar_lea.hbm %s2, %s151
        %s153 = scalar_lea.vmem %s113, %s148 [#allocation8]
        %s154 = scalar_lea.sflag [#allocation2], 2
        // Predicated region
        $region37: #{tpu_custom_call.1} parent=23 // pred_check
          _
        $region38: #{tpu_custom_call.1} parent=23 // pred_check_branch
          %156 = sbr.rel target = $region40
        $region39: #{tpu_custom_call.1} parent=23 // pred_region
          %157 = sst [smem:[#allocation11]] [#allocation16]
          %158 = sst [smem:[#allocation12]] [#allocation15]
        $region40: #{tpu_custom_call.1} parent=23 // pred_fallthru
          _
        %160 = shalt.err (0)
        %s162 = sshll.u32 %s153, 4
        %s163 = int_to_ptr.vmem [resolvable:$true] %s162
        %165 = dma.hbm_to_vmem [thread:$0]  %s152, 16, %s163, %s154
        %s166 = sadd.s32 0, 3
        %s167 = sadd.s32 %s114, %s166
        %s168 = sld [smem:[#allocation4 + %s167]]
        %s169 = smul.addr %s168, 16
        %s170 = scalar_lea.hbm %s2, %s169
        %s171 = scalar_lea.vmem %s113, %s166 [#allocation8]
        %s172 = scalar_lea.sflag [#allocation2], 3
        // Predicated region
        $region41: #{tpu_custom_call.1} parent=23 // pred_check
          _
        $region42: #{tpu_custom_call.1} parent=23 // pred_check_branch
          %174 = sbr.rel target = $region44
        $region43: #{tpu_custom_call.1} parent=23 // pred_region
          %175 = sst [smem:[#allocation11]] [#allocation18]
          %176 = sst [smem:[#allocation12]] [#allocation17]
        $region44: #{tpu_custom_call.1} parent=23 // pred_fallthru
          _
        %178 = shalt.err (0)
        %s180 = sshll.u32 %s171, 4
        %s181 = int_to_ptr.vmem [resolvable:$true] %s180
        %183 = dma.hbm_to_vmem [thread:$0]  %s170, 16, %s181, %s172
        %s184 = sadd.s32 0, 4
        %s185 = sadd.s32 %s114, %s184
        %s186 = sld [smem:[#allocation4 + %s185]]
        %s187 = smul.addr %s186, 16
        %s188 = scalar_lea.hbm %s2, %s187
        %s189 = scalar_lea.vmem %s113, %s184 [#allocation8]
        %s190 = scalar_lea.sflag [#allocation2], 4
        // Predicated region
        $region45: #{tpu_custom_call.1} parent=23 // pred_check
          _
        $region46: #{tpu_custom_call.1} parent=23 // pred_check_branch
          %192 = sbr.rel target = $region48
        $region47: #{tpu_custom_call.1} parent=23 // pred_region
          %193 = sst [smem:[#allocation11]] [#allocation20]
          %194 = sst [smem:[#allocation12]] [#allocation19]
        $region48: #{tpu_custom_call.1} parent=23 // pred_fallthru
          _
        %196 = shalt.err (0)
        %s198 = sshll.u32 %s189, 4
        %s199 = int_to_ptr.vmem [resolvable:$true] %s198
        %201 = dma.hbm_to_vmem [thread:$0]  %s188, 16, %s199, %s190
        %s202 = sadd.s32 0, 5
        %s203 = sadd.s32 %s114, %s202
        %s204 = sld [smem:[#allocation4 + %s203]]
        %s205 = smul.addr %s204, 16
        %s206 = scalar_lea.hbm %s2, %s205
        %s207 = scalar_lea.vmem %s113, %s202 [#allocation8]
        %s208 = scalar_lea.sflag [#allocation2], 5
        // Predicated region
        $region49: #{tpu_custom_call.1} parent=23 // pred_check
          _
        $region50: #{tpu_custom_call.1} parent=23 // pred_check_branch
          %210 = sbr.rel target = $region52
        $region51: #{tpu_custom_call.1} parent=23 // pred_region
          %211 = sst [smem:[#allocation11]] [#allocation22]
          %212 = sst [smem:[#allocation12]] [#allocation21]
        $region52: #{tpu_custom_call.1} parent=23 // pred_fallthru
          _
        %214 = shalt.err (0)
        %s216 = sshll.u32 %s207, 4
        %s217 = int_to_ptr.vmem [resolvable:$true] %s216
        %219 = dma.hbm_to_vmem [thread:$0]  %s206, 16, %s217, %s208
        %s220 = sadd.s32 0, 6
        %s221 = sadd.s32 %s114, %s220
        %s222 = sld [smem:[#allocation4 + %s221]]
        %s223 = smul.addr %s222, 16
        %s224 = scalar_lea.hbm %s2, %s223
        %s225 = scalar_lea.vmem %s113, %s220 [#allocation8]
        %s226 = scalar_lea.sflag [#allocation2], 6
        // Predicated region
        $region53: #{tpu_custom_call.1} parent=23 // pred_check
          _
        $region54: #{tpu_custom_call.1} parent=23 // pred_check_branch
          %228 = sbr.rel target = $region56
        $region55: #{tpu_custom_call.1} parent=23 // pred_region
          %229 = sst [smem:[#allocation11]] [#allocation24]
          %230 = sst [smem:[#allocation12]] [#allocation23]
        $region56: #{tpu_custom_call.1} parent=23 // pred_fallthru
          _
        %232 = shalt.err (0)
        %s234 = sshll.u32 %s225, 4
        %s235 = int_to_ptr.vmem [resolvable:$true] %s234
        %237 = dma.hbm_to_vmem [thread:$0]  %s224, 16, %s235, %s226
        %s238 = sadd.s32 0, 7
        %s239 = sadd.s32 %s114, %s238
        %s240 = sld [smem:[#allocation4 + %s239]]
        %s241 = smul.addr %s240, 16
        %s242 = scalar_lea.hbm %s2, %s241
        %s243 = scalar_lea.vmem %s113, %s238 [#allocation8]
        %s244 = scalar_lea.sflag [#allocation2], 7
        // Predicated region
        $region57: #{tpu_custom_call.1} parent=23 // pred_check
          _
        $region58: #{tpu_custom_call.1} parent=23 // pred_check_branch
          %246 = sbr.rel target = $region60
        $region59: #{tpu_custom_call.1} parent=23 // pred_region
          %247 = sst [smem:[#allocation11]] [#allocation26]
          %248 = sst [smem:[#allocation12]] [#allocation25]
        $region60: #{tpu_custom_call.1} parent=23 // pred_fallthru
          _
        %250 = shalt.err (0)
        %s252 = sshll.u32 %s243, 4
        %s253 = int_to_ptr.vmem [resolvable:$true] %s252
        %255 = dma.hbm_to_vmem [thread:$0]  %s242, 16, %s253, %s244
        %s256 = smul.u32 1, 1
        %s257 = sshll.u32 %s256, 4
        %258 = dma.done [#allocation2], %s257
        %s259 = sshll.u32 %s256, 4
        %260 = dma.done %s136, %s259
        %s261 = sshll.u32 %s256, 4
        %262 = dma.done %s154, %s261
        %s263 = sshll.u32 %s256, 4
        %264 = dma.done %s172, %s263
        %s265 = sshll.u32 %s256, 4
        %266 = dma.done %s190, %s265
        %s267 = sshll.u32 %s256, 4
        %268 = dma.done %s208, %s267
        %s269 = sshll.u32 %s256, 4
        %270 = dma.done %s226, %s269
        %s271 = sshll.u32 %s256, 4
        %272 = dma.done %s244, %s271
        %v273 = vld [vmem:[%s113] sm:$0xff]
        %v274 = vld [vmem:[#allocation5] sm:$0xff]
        %v275 = vadd.f32 %v273, %v274
        %276 = vst [vmem:[%s113] sm:$0xff] %v275
        %s277 = sand.u32 %s51, 1
        %s278 = scalar_lea.sflag [#allocation7], %s277
        %s279 = sand.u32 %s51, 1
        %s280 = smul.addr %s279, 8
        %s281 = scalar_lea.vmem [#allocation8], %s280
        // Predicated region
        $region61: #{tpu_custom_call.1} parent=23 // pred_check
          %p282 = pneg %p61
        $region62: #{tpu_custom_call.1} parent=23 // pred_check_branch
          %284 = sbr.rel (%p282) target = $region64
        $region63: #{tpu_custom_call.1} parent=23 // pred_region
          %s286 = ssub.s32 128, 128
          %287 = vsyncadd %s278, %s286
          %s288 = smul.addr %s22, 128
          %s289 = scalar_lea.hbm %s3, %s288
          %s291 = sshll.u32 %s281, 4
          %s292 = int_to_ptr.vmem [resolvable:$true] %s291
          %294 = dma.vmem_to_hbm [thread:$0]  %s292, 128, %s289, %s278
        $region64: #{tpu_custom_call.1} parent=23 // pred_fallthru
          _
      $region24: #{tpu_custom_call.1} parent=5 // pred_fallthru
        _
      %p295 = scmp.le.s32.totalorder 2, %s17
      // Predicated region
      $region65: #{tpu_custom_call.1} parent=5 // pred_check
        %p296 = pneg %p295
      $region66: #{tpu_custom_call.1} parent=5 // pred_check_branch
        %298 = sbr.rel (%p296) target = $region68
      $region67: #{tpu_custom_call.1} parent=5 // pred_region
        %s299 = ssub.s32 %s17, 2
        // Predicated region
        $region69: #{tpu_custom_call.1} parent=67 // pred_check
          %p300 = pneg %p67
        $region70: #{tpu_custom_call.1} parent=67 // pred_check_branch
          %302 = sbr.rel (%p300) target = $region72
        $region71: #{tpu_custom_call.1} parent=67 // pred_region
          %s303 = sand.u32 %s52, 1
          %s304 = scalar_lea.sflag [#allocation7], %s303
          %s305 = sand.u32 %s52, 1
          %s306 = smul.addr %s305, 8
          %s307 = scalar_lea.vmem [#allocation8], %s306
          %308 = dma.done %s304, 128
        $region72: #{tpu_custom_call.1} parent=67 // pred_fallthru
          _
      $region68: #{tpu_custom_call.1} parent=5 // pred_fallthru
        _
    $region6: #{tpu_custom_call.1} parent=1 // loop_footer
      %s21 = sadd.s32 1, %s17
    $region7: #{tpu_custom_call.1} parent=1 // loop_footer_branch
      %16 = sbr.rel target = $region3
    $region8: #{tpu_custom_call.1} parent=1 // loop_exit
      _
    %309 = vsyncpa [#allocation6], 1
    %s310 = scalar_lea.sflag [#allocation6], 1
    %311 = vsyncpa %s310, 1
    %312 = vsyncpa [#allocation7], 1
    %s313 = scalar_lea.sflag [#allocation7], 1
    %314 = vsyncpa %s313, 1
  %315 = vsyncmov [#allocation2]
  %s316 = vpop.sfrf %315
  %p317 = scmp.eq.s32.totalorder %s316, 0
  %p318 = pneg %p317
  %320 = shalt.err (%p318)
  %s321 = scalar_lea.sflag [#allocation2], 1
  %322 = vsyncmov %s321
  %s323 = vpop.sfrf %322
  %p324 = scmp.eq.s32.totalorder %s323, 0
  %p325 = pneg %p324
  %327 = shalt.err (%p325)
  %s328 = scalar_lea.sflag [#allocation2], 2
  %329 = vsyncmov %s328
  %s330 = vpop.sfrf %329
  %p331 = scmp.eq.s32.totalorder %s330, 0
  %p332 = pneg %p331
  %334 = shalt.err (%p332)
  %s335 = scalar_lea.sflag [#allocation2], 3
  %336 = vsyncmov %s335
  %s337 = vpop.sfrf %336
  %p338 = scmp.eq.s32.totalorder %s337, 0
  %p339 = pneg %p338
  %341 = shalt.err (%p339)
  %s342 = scalar_lea.sflag [#allocation2], 4
  %343 = vsyncmov %s342
  %s344 = vpop.sfrf %343
  %p345 = scmp.eq.s32.totalorder %s344, 0
  %p346 = pneg %p345
  %348 = shalt.err (%p346)
  %s349 = scalar_lea.sflag [#allocation2], 5
  %350 = vsyncmov %s349
  %s351 = vpop.sfrf %350
  %p352 = scmp.eq.s32.totalorder %s351, 0
  %p353 = pneg %p352
  %355 = shalt.err (%p353)
  %s356 = scalar_lea.sflag [#allocation2], 6
  %357 = vsyncmov %s356
  %s358 = vpop.sfrf %357
  %p359 = scmp.eq.s32.totalorder %s358, 0
  %p360 = pneg %p359
  %362 = shalt.err (%p360)
  %s363 = scalar_lea.sflag [#allocation2], 7
  %364 = vsyncmov %s363
  %s365 = vpop.sfrf %364
  %p366 = scmp.eq.s32.totalorder %s365, 0
  %p367 = pneg %p366
  %369 = shalt.err (%p367)

</llo_original>
